<compile_context>
chip_gen: v6e
topology: v6e:2x2x1
jax: 0.10.0
libtpu: 0.0.40
codegen_flags: <defaults>
</compile_context>

<pallas_src>
import math

import jax
import jax.numpy as jnp
from jax.experimental import pallas as pl
from jax.experimental.pallas import tpu as pltpu


def attention_kernel(x_ref, w_ref, b_ref, o_ref):
    """One batch tile.

    x_ref: (Bt, S, F)   w_ref: (1, F)   b_ref: (1, S)   o_ref: (Bt, F)
    """
    x = x_ref[...]                                   # (Bt, S, F), input dtype
    w = w_ref[...].astype(x.dtype)                   # (1, F)
    b = b_ref[...].astype(jnp.float32)               # (1, S)

    # Scores: lane-dense VPU multiply in the input dtype, f32 accumulation on
    # the XLU lane reduce. No N=1 MXU matmul.
    eij = jnp.sum(x * w[None, :, :], axis=-1, dtype=jnp.float32)   # (Bt, S)
    eij = jnp.tanh(eij + b)                                        # (Bt, S)
    a = jnp.exp(eij)                                               # (Bt, S)

    denom = jnp.sum(a, axis=-1, keepdims=True) + 1e-10             # (Bt, 1)
    a = a / denom                                                  # exact divide

    # Weighted sum over S: multiply in the input dtype, accumulate in f32.
    a_x = a.astype(x.dtype)
    out = jnp.sum(x * a_x[:, :, None], axis=1, dtype=jnp.float32)  # (Bt, F)
    o_ref[...] = out.astype(o_ref.dtype)


def _vmem_capacity_bytes():
    """Physical VMEM of the current generation; conservative fallback (v7x)."""
    try:
        info = pltpu.get_tpu_info()
        cap = getattr(info, "vmem_capacity_bytes", None)
        if cap:
            return int(cap)
    except Exception:
        pass
    return 64 * 1024 * 1024


def _choose_block_b(batch, step, feat, in_itemsize, vmem_cap):
    """Batch tile that (a) fits a generation-aware VMEM budget including the
    in-kernel f32 temporaries, (b) leaves >= 4 grid steps when possible (v7x
    megacore + DMA/compute overlap), and (c) keeps the output block's
    second-to-last dim a multiple of 8 (or the full batch)."""
    if batch <= 8:
        return batch

    budget = min(vmem_cap // 4, 32 * 1024 * 1024)
    # Per batch-row resident bytes: double-buffered input block at the input
    # width + ~2x f32 for product / upcast temporaries inside the kernel.
    bytes_per_row = step * feat * (2 * in_itemsize + 2 * 4)
    cap = max(1, budget // bytes_per_row)

    # Keep at least 4 grid steps so pipelining / megacore sharding has work.
    min_steps = 4
    cap = min(cap, -(-batch // min_steps))          # ceil(batch / min_steps)

    # Output block (block_b, F): block_b must be a multiple of 8 or == batch.
    cap = max(8, (cap // 8) * 8)
    if cap >= batch:
        return batch

    # Prefer the largest multiple-of-8 divisor of batch <= cap (no partial
    # trailing block); otherwise fall back to the multiple-of-8 cap (partial
    # trailing block is safe: rows are independent and the store is masked).
    d = cap
    while d >= 8:
        if batch % d == 0:
            return d
        d -= 8
    return cap


def attention_forward(x, weight, bias, *, block_b=None):
    """x: (B, S, F); weight: (F, 1); bias: (S,).  Returns (B, F)."""
    B, S, F = x.shape
    w2d = weight.reshape(1, F)
    b2d = bias.reshape(1, S)

    vmem_cap = _vmem_capacity_bytes()
    if block_b is None:
        block_b = _choose_block_b(B, S, F, x.dtype.itemsize, vmem_cap)
    block_b = min(block_b, B)

    grid = (pl.cdiv(B, block_b),)

    itemsize = x.dtype.itemsize
    cost = pl.CostEstimate(
        flops=4 * B * S * F,                 # 2 multiplies + 2 add-reduces
        transcendentals=2 * B * S,           # tanh + exp
        bytes_accessed=(B * S * F + B * F) * itemsize
        + F * weight.dtype.itemsize
        + S * bias.dtype.itemsize,
    )

    out = pl.pallas_call(
        attention_kernel,
        out_shape=jax.ShapeDtypeStruct((B, F), x.dtype),
        grid=grid,
        in_specs=[
            pl.BlockSpec((block_b, S, F), lambda i: (i, 0, 0)),   # x: batch-tiled
            pl.BlockSpec((1, F), lambda i: (0, 0)),               # w: resident
            pl.BlockSpec((1, S), lambda i: (0, 0)),               # b: resident
        ],
        out_specs=pl.BlockSpec((block_b, F), lambda i: (i, 0)),
        compiler_params=pltpu.CompilerParams(
            dimension_semantics=("parallel",),
            vmem_limit_bytes=min(vmem_cap // 2, 96 * 1024 * 1024),
        ),
        cost_estimate=cost,
    )(x, w2d, b2d)
    return out


def attention_reference(x, weight, bias):
    """Pure-JAX reference for correctness checking."""
    B, S, F = x.shape
    eij = (x.reshape(-1, F) @ weight).reshape(B, S) + bias
    eij = jnp.tanh(eij)
    a = jnp.exp(eij)
    a = a / (jnp.sum(a, axis=1, keepdims=True) + 1e-10)
    return jnp.sum(x * a[..., None], axis=1)


if __name__ == "__main__":
    # Small shapes consistent with the module: feature_dim=32, step_dim=8, batch=4.
    B, S, F = 4, 8, 32

    key = jax.random.PRNGKey(0)
    kx, kw = jax.random.split(key)

    x = jax.random.normal(kx, (B, S, F), dtype=jnp.float32)

    # kaiming_uniform_ on a (feature_dim, 1) tensor: fan_in = 1 -> bound = sqrt(6).
    bound = math.sqrt(6.0)
    weight = jax.random.uniform(kw, (F, 1), minval=-bound, maxval=bound,
                                dtype=jnp.float32)
    bias = jnp.zeros((S,), dtype=jnp.float32)   # self.b = zeros(step_dim)

    out = jax.block_until_ready(attention_forward(x, weight, bias))
    ref = attention_reference(x, weight, bias)

    assert out.shape == (B, F)
    assert jnp.allclose(out, ref, atol=1e-5, rtol=1e-5), \
        float(jnp.max(jnp.abs(out - ref)))

    print("KERNEL_OK")
</pallas_src>

<mosaic_0001>
module attributes {stable_mosaic.version = 11 : i64} {
  func.func @attention_kernel(%arg0: i32, %arg1: memref<4x8x32xf32, #tpu.memory_space<vmem>>, %arg2: memref<1x32xf32, #tpu.memory_space<vmem>>, %arg3: memref<1x8xf32, #tpu.memory_space<vmem>>, %arg4: memref<4x32xf32, #tpu.memory_space<vmem>>) attributes {dimension_semantics = [#tpu.dimension_semantics<parallel>], iteration_bounds = array<i64: 1>, scalar_prefetch = 0 : i64, scratch_operands = 0 : i64, tpu.core_type = #tpu.core_type<tc>, window_params = [{transform_indices = @transform_0, window_bounds = array<i64: 4, 8, 32>}, {pipeline_mode = #tpu.pipeline_mode<synchronous>, transform_indices = @transform_1, window_bounds = array<i64: 1, 32>}, {pipeline_mode = #tpu.pipeline_mode<synchronous>, transform_indices = @transform_2, window_bounds = array<i64: 1, 8>}, {transform_indices = @transform_3, window_bounds = array<i64: 4, 32>}]} {
    %c0 = arith.constant 0 : index
    %c0_0 = arith.constant 0 : index
    %c0_1 = arith.constant 0 : index
    %0 = vector.load %arg1[%c0, %c0_0, %c0_1] : memref<4x8x32xf32, #tpu.memory_space<vmem>>, vector<4x8x32xf32>
    %c0_2 = arith.constant 0 : index
    %c0_3 = arith.constant 0 : index
    %1 = vector.load %arg2[%c0_2, %c0_3] : memref<1x32xf32, #tpu.memory_space<vmem>>, vector<1x32xf32>
    %c0_4 = arith.constant 0 : index
    %c0_5 = arith.constant 0 : index
    %2 = vector.load %arg3[%c0_4, %c0_5] : memref<1x8xf32, #tpu.memory_space<vmem>>, vector<1x8xf32>
    %3 = vector.shape_cast %1 : vector<1x32xf32> to vector<1x1x32xf32>
    %4 = vector.broadcast %3 : vector<1x1x32xf32> to vector<4x8x32xf32>
    %5 = arith.mulf %0, %4 : vector<4x8x32xf32>
    %cst = arith.constant dense<0.000000e+00> : vector<4x8xf32>
    %6 = vector.multi_reduction <add>, %5, %cst [2] : vector<4x8x32xf32> to vector<4x8xf32>
    %7 = vector.broadcast %2 : vector<1x8xf32> to vector<4x8xf32>
    %8 = arith.addf %6, %7 : vector<4x8xf32>
    %9 = math.tanh %8 : vector<4x8xf32>
    %10 = math.exp %9 : vector<4x8xf32>
    %cst_6 = arith.constant dense<0.000000e+00> : vector<4xf32>
    %11 = vector.multi_reduction <add>, %10, %cst_6 [1] : vector<4x8xf32> to vector<4xf32>
    %12 = vector.shape_cast %11 : vector<4xf32> to vector<4x1xf32>
    %cst_7 = arith.constant 1.000000e-10 : f32
    %13 = vector.broadcast %cst_7 : f32 to vector<4x1xf32>
    %14 = arith.addf %12, %13 : vector<4x1xf32>
    %15 = vector.broadcast %14 : vector<4x1xf32> to vector<4x8xf32>
    %16 = arith.divf %10, %15 : vector<4x8xf32>
    %17 = vector.shape_cast %16 : vector<4x8xf32> to vector<4x8x1xf32>
    %18 = vector.broadcast %17 : vector<4x8x1xf32> to vector<4x8x32xf32>
    %19 = arith.mulf %0, %18 : vector<4x8x32xf32>
    %cst_8 = arith.constant dense<0.000000e+00> : vector<4x32xf32>
    %20 = vector.multi_reduction <add>, %19, %cst_8 [1] : vector<4x8x32xf32> to vector<4x32xf32>
    %c0_9 = arith.constant 0 : index
    %c0_10 = arith.constant 0 : index
    %21 = vector.load %arg4[%c0_9, %c0_10] : memref<4x32xf32, #tpu.memory_space<vmem>>, vector<4x32xf32>
    tpu.vector_store %arg4[%c0_9, %c0_10], %20 {strides = array<i32>} : memref<4x32xf32, #tpu.memory_space<vmem>>, vector<4x32xf32>,
    return
  }
  func.func @transform_0(%arg0: i32) -> (i32, i32, i32) {
    %c0_i32 = arith.constant 0 : i32
    %c0_i32_0 = arith.constant 0 : i32
    %c0_i32_1 = arith.constant 0 : i32
    return %arg0, %c0_i32, %c0_i32_0 : i32, i32, i32
  }
  func.func @transform_1(%arg0: i32) -> (i32, i32) {
    %c0_i32 = arith.constant 0 : i32
    %c0_i32_0 = arith.constant 0 : i32
    %c0_i32_1 = arith.constant 0 : i32
    return %c0_i32, %c0_i32_0 : i32, i32
  }
  func.func @transform_2(%arg0: i32) -> (i32, i32) {
    %c0_i32 = arith.constant 0 : i32
    %c0_i32_0 = arith.constant 0 : i32
    %c0_i32_1 = arith.constant 0 : i32
    return %c0_i32, %c0_i32_0 : i32, i32
  }
  func.func @transform_3(%arg0: i32) -> (i32, i32) {
    %c0_i32 = arith.constant 0 : i32
    %c0_i32_0 = arith.constant 0 : i32
    return %arg0, %c0_i32 : i32, i32
  }
}

</mosaic_0001>

<llo_original>
// kernel: tpu_custom_call.1
$region0: #{tpu_custom_call.1}
  #allocation0 [shape = 'u32[]', space=smem, size = 0x4, offset = 0x4, fixed_abs, tag = 'smem constant byte address 0x4 - core index']
  #allocation1 [shape = 'u32[144,128]{1,0:T(1,128)}', space=vmem, size = 0x12000, scoped, tag = 'internal scratch']
  %s0 = inlined_call_operand.hbm [shape: f32[4,8,32], index: 0, kind: input, shape index: {}]
  %s1 = inlined_call_operand.vmem [shape: f32[1,32], index: 1, kind: input, shape index: {}]
  %s2 = inlined_call_operand.vmem [shape: f32[1,8], index: 2, kind: input, shape index: {}]
  %s3 = inlined_call_operand.hbm [shape: f32[4,32], index: 3, kind: output, shape index: {}]
  %s4 = sld [smem:[#allocation0]]
  $region26: #{tpu_custom_call.1} parent=0
    _
  %s6 = ssub.s32 1, %s4
  %s7 = scalar_select 0, %s6, %s4
  $region1: #{tpu_custom_call.1} parent=0
    #allocation2 [shape = 'u8[16384]{0}', space=vmem, size = 0x4000, scoped, tag = 'input window, operand 0, single buffered']
    #allocation3 [shape = 's32[1]{0}', space=sflag, size = 0x4, scoped, tag = 'scoped memory for tpu_custom_call.1']
    #allocation4 [shape = 's32[1]{0}', space=sflag, size = 0x4, scoped, tag = 'scoped memory for tpu_custom_call.1']
    #allocation5 [shape = 'u8[2048]{0}', space=vmem, size = 0x800, scoped, tag = 'output window, operand 0, single buffered']
    %8 = vsyncpa [#allocation3], 0
    %9 = vsyncpa [#allocation4], 0
    // Predicated region
    $region2: #{tpu_custom_call.1} parent=1 // pred_check
      _
    $region3: #{tpu_custom_call.1} parent=1 // pred_check_branch
      %11 = sbr.rel (0) target = $region5
    $region4: #{tpu_custom_call.1} parent=1 // pred_region
      %s13 = ssub.s32 512, 512
      %14 = vsyncadd [#allocation3], %s13
      %s15 = sshll.u32 [#allocation2], 4
      %s16 = int_to_ptr.vmem [resolvable:$true] %s15
      %21 = dma.hbm_to_vmem [thread:$0]  %s0, 512, %s16, [#allocation3], 128, 128, 8
    $region5: #{tpu_custom_call.1} parent=1 // pred_fallthru
      _
    // Predicated region
    $region6: #{tpu_custom_call.1} parent=1 // pred_check
      _
    $region7: #{tpu_custom_call.1} parent=1 // pred_check_branch
      %23 = sbr.rel (0) target = $region9
    $region8: #{tpu_custom_call.1} parent=1 // pred_region
      _
    $region9: #{tpu_custom_call.1} parent=1 // pred_fallthru
      _
    // Predicated region
    $region10: #{tpu_custom_call.1} parent=1 // pred_check
      _
    $region11: #{tpu_custom_call.1} parent=1 // pred_check_branch
      %25 = sbr.rel (0) target = $region13
    $region12: #{tpu_custom_call.1} parent=1 // pred_region
      _
    $region13: #{tpu_custom_call.1} parent=1 // pred_fallthru
      _
    // Predicated region
    $region14: #{tpu_custom_call.1} parent=1 // pred_check
      _
    $region15: #{tpu_custom_call.1} parent=1 // pred_check_branch
      %27 = sbr.rel (0) target = $region17
    $region16: #{tpu_custom_call.1} parent=1 // pred_region
      %28 = dma.done [#allocation3], 512
    $region17: #{tpu_custom_call.1} parent=1 // pred_fallthru
      _
    %v29 = vld [vmem:[#allocation2] sm:$0xff]
    %v30 = vld [vmem:[#allocation2 + $0x8] sm:$0xff]
    %v31 = vld [vmem:[#allocation2 + $0x10] sm:$0xff]
    %v32 = vld [vmem:[#allocation2 + $0x18] sm:$0xff]
    %v33 = vld [vmem:[%s1] sm:$0x1]
    %v34 = vld [vmem:[%s2] sm:$0x1]
    %v36 = vlaneseq
    %v37 = vshrl.u32 %v36, 7
    %v38 = vsub.s32 0, %v37
    %v39 = vrot.slane %v33, %v38
    %v41 = vmul.f32 %v29, %v39
    %v42 = vmul.f32 %v30, %v39
    %v43 = vmul.f32 %v31, %v39
    %v44 = vmul.f32 %v32, %v39
    %vm45 = vcmask 261120
    %v46 = vsel %vm45, %v41, 0.0
    %47 = vadd.xlane.f32.xlu0 %v46
    %v48 = vpop.xlane.xlu0 %47
    %v49 = vsel %vm45, %v42, 0.0
    %50 = vadd.xlane.f32.xlu0 %v49
    %v51 = vpop.xlane.xlu0 %50
    %v52 = vsel %vm45, %v43, 0.0
    %53 = vadd.xlane.f32.xlu0 %v52
    %v54 = vpop.xlane.xlu0 %53
    %v55 = vsel %vm45, %v44, 0.0
    %56 = vadd.xlane.f32.xlu0 %v55
    %v57 = vpop.xlane.xlu0 %56
    %v59 = vlaneseq
    %v60 = vshrl.u32 %v59, 7
    %v61 = vsub.s32 0, %v60
    %v62 = vrot.slane %v34, %v61
    %64 = vbcast.lane.b32.xlu0 %v62, 256
    %v65 = vpop.permute.xlu0 %64
    %v67 = vadd.f32 %v48, %v65
    %v68 = vadd.f32 %v51, %v65
    %v69 = vadd.f32 %v54, %v65
    %v70 = vadd.f32 %v57, %v65
    %v71 = vtanh.pop %v67
    %v72 = vtanh.pop %v68
    %v73 = vtanh.pop %v69
    %v74 = vtanh.pop %v70
    %v75 = vmul.f32 %v71, 1.442695
    %v76 = vpow.pop %v75
    %v77 = vmul.f32 %v72, 1.442695
    %v78 = vpow.pop %v77
    %v79 = vmul.f32 %v73, 1.442695
    %v80 = vpow.pop %v79
    %v81 = vmul.f32 %v74, 1.442695
    %v82 = vpow.pop %v81
    %87 = vset.pattern.permute.xlu0 0
    %88 = vperm.xlu0 %87, %v76
    %v89 = vpop.permute.xlu0 %88
    %90 = vset.pattern.permute.xlu0 0
    %91 = vperm.xlu0 %90, %v78
    %v92 = vpop.permute.xlu0 %91
    %93 = vset.pattern.permute.xlu0 0
    %94 = vperm.xlu0 %93, %v80
    %v95 = vpop.permute.xlu0 %94
    %96 = vset.pattern.permute.xlu0 0
    %97 = vperm.xlu0 %96, %v82
    %v98 = vpop.permute.xlu0 %97
    %v99 = vlaneseq
    %v100 = vand.u32 %v99, 127
    %v101 = vlaneseq
    %v102 = vshrl.u32 %v101, 7
    %v103 = vsub.s32 %v100, %v102
    %v104 = vrot.slane %v89, %v103
    %v105 = vlaneseq
    %v106 = vshrl.u32 %v105, 7
    %v107 = vsub.s32 %v100, %v106
    %v108 = vrot.slane %v92, %v107
    %v109 = vlaneseq
    %v110 = vshrl.u32 %v109, 7
    %v111 = vsub.s32 %v100, %v110
    %v112 = vrot.slane %v95, %v111
    %v113 = vlaneseq
    %v114 = vshrl.u32 %v113, 7
    %v115 = vsub.s32 %v100, %v114
    %v116 = vrot.slane %v98, %v115
    %vm117 = vcmask 1041409
    %v118 = vsel %vm117, %v108, %v104
    %vm119 = vcmask 1042434
    %v120 = vsel %vm119, %v112, %v118
    %vm121 = vcmask 1043459
    %v122 = vsel %vm121, %v116, %v120
    %vm124 = vcmask 60416
    %v125 = vsel %vm124, %v122, 0.0
    %126 = vadd.xlane.f32.xlu0 %v125
    %v127 = vpop.xlane.xlu0 %126
    %v128 = vadd.f32 %v127, 1e-10
    %v130 = vlaneseq
    %v131 = vshrl.u32 %v130, 7
    %v132 = vsub.s32 0, %v131
    %v133 = vrot.slane %v128, %v132
    %v134 = vlaneseq
    %v135 = vshrl.u32 %v134, 7
    %v136 = vsub.s32 1, %v135
    %v137 = vrot.slane %v128, %v136
    %v138 = vlaneseq
    %v139 = vshrl.u32 %v138, 7
    %v140 = vsub.s32 2, %v139
    %v141 = vrot.slane %v128, %v140
    %v142 = vlaneseq
    %v143 = vshrl.u32 %v142, 7
    %v144 = vsub.s32 3, %v143
    %v145 = vrot.slane %v128, %v144
    %v150 = vrcp.pop %v133
    %v151 = vmul.f32 %v76, %v150
    %v152 = vrcp.pop %v137
    %v153 = vmul.f32 %v78, %v152
    %v154 = vrcp.pop %v141
    %v155 = vmul.f32 %v80, %v154
    %v156 = vrcp.pop %v145
    %v157 = vmul.f32 %v82, %v156
    %159 = vset.pattern.permute.xlu0 0
    %160 = vperm.xlu0 %159, %v151
    %v161 = vpop.permute.xlu0 %160
    %164 = vset.pattern.permute.xlu0 0
    %165 = vperm.xlu0 %164, %v153
    %v166 = vpop.permute.xlu0 %165
    %169 = vset.pattern.permute.xlu0 0
    %170 = vperm.xlu0 %169, %v155
    %v171 = vpop.permute.xlu0 %170
    %174 = vset.pattern.permute.xlu0 0
    %175 = vperm.xlu0 %174, %v157
    %v176 = vpop.permute.xlu0 %175
    %v178 = vmul.f32 %v29, %v161
    %v179 = vmul.f32 %v30, %v166
    %v180 = vmul.f32 %v31, %v171
    %v181 = vmul.f32 %v32, %v176
    %v182 = vsel %vm45, %v178, 0.0
    %v183 = vrot.slane %v182, 4
    %v184 = vadd.f32 %v182, %v183
    %v185 = vrot.slane %v184, 2
    %v186 = vadd.f32 %v184, %v185
    %v187 = vrot.slane %v186, 1
    %v188 = vadd.f32 %v186, %v187
    %v189 = vsel %vm45, %v179, 0.0
    %v190 = vrot.slane %v189, 4
    %v191 = vadd.f32 %v189, %v190
    %v192 = vrot.slane %v191, 2
    %v193 = vadd.f32 %v191, %v192
    %v194 = vrot.slane %v193, 1
    %v195 = vadd.f32 %v193, %v194
    %v196 = vsel %vm45, %v180, 0.0
    %v197 = vrot.slane %v196, 4
    %v198 = vadd.f32 %v196, %v197
    %v199 = vrot.slane %v198, 2
    %v200 = vadd.f32 %v198, %v199
    %v201 = vrot.slane %v200, 1
    %v202 = vadd.f32 %v200, %v201
    %v203 = vsel %vm45, %v181, 0.0
    %v204 = vrot.slane %v203, 4
    %v205 = vadd.f32 %v203, %v204
    %v206 = vrot.slane %v205, 2
    %v207 = vadd.f32 %v205, %v206
    %v208 = vrot.slane %v207, 1
    %v209 = vadd.f32 %v207, %v208
    %v214 = vsel %vm117, %v195, %v188
    %v215 = vsel %vm119, %v202, %v214
    %v216 = vsel %vm121, %v209, %v215
    %vm218 = vcmask 257024
    %219 = vst.msk [vmem:[#allocation5] sm:$0xf] %vm218, %v216
    // Predicated region
    $region18: #{tpu_custom_call.1} parent=1 // pred_check
      _
    $region19: #{tpu_custom_call.1} parent=1 // pred_check_branch
      %221 = sbr.rel (0) target = $region21
    $region20: #{tpu_custom_call.1} parent=1 // pred_region
      %s223 = ssub.s32 64, 64
      %224 = vsyncadd [#allocation4], %s223
      %s226 = sshll.u32 [#allocation5], 4
      %s227 = int_to_ptr.vmem [resolvable:$true] %s226
      %229 = dma.vmem_to_hbm [thread:$0]  %s227, 64, %s3, [#allocation4]
    $region21: #{tpu_custom_call.1} parent=1 // pred_fallthru
      _
    // Predicated region
    $region22: #{tpu_custom_call.1} parent=1 // pred_check
      _
    $region23: #{tpu_custom_call.1} parent=1 // pred_check_branch
      %231 = sbr.rel (0) target = $region25
    $region24: #{tpu_custom_call.1} parent=1 // pred_region
      %232 = dma.done [#allocation4], 64
    $region25: #{tpu_custom_call.1} parent=1 // pred_fallthru
      _
    %233 = vsyncpa [#allocation3], 1
    %234 = vsyncpa [#allocation4], 1

</llo_original>
